<compile_context>
chip_gen: v5e
topology: v5e:2x2
jax: 0.10.0
libtpu: 0.0.40
codegen_flags: <defaults>
</compile_context>

<pallas_src>
import jax
import jax.numpy as jnp
from jax.experimental import pallas as pl
from jax.experimental.pallas import tpu as pltpu


# ----------------------------- hardware queries -------------------------------------------

def _device_kind():
    try:
        return jax.devices()[0].device_kind.lower()
    except Exception:
        return ""


def _vmem_capacity_bytes():
    try:
        cap = getattr(pltpu.get_tpu_info(), "vmem_capacity_bytes", None)
        if cap:
            return int(cap)
    except Exception:
        pass
    kind = _device_kind()
    if ("v5" in kind) or ("v6" in kind):
        return 128 * 1024 * 1024
    return 64 * 1024 * 1024            # v7x, and conservative default for unknown devices


def _mxu_dim():
    kind = _device_kind()
    if ("v6" in kind) or ("v7" in kind):
        return 256
    return 128                          # v5e and older, and conservative default


def _sublane_multiple(dtype):
    # f32 -> 8, bf16 -> 16, int8/fp8 -> 32 (sub-32-bit dtypes pack along sublanes).
    return {4: 8, 2: 16, 1: 32}.get(jnp.dtype(dtype).itemsize, 8)


# ----------------------------- kernels -----------------------------------------------------

def _make_resident_kernel(ng, gK, gN, store_per_group):
    """Path A: packed weights fully VMEM-resident; group loop statically unrolled."""
    def kernel(x_ref, w_ref, o_ref):
        # x_ref: (tb, ng*gK)   w_ref: (ng, gK, gN)   o_ref: (tb, ng*gN)
        if store_per_group:
            for grp in range(ng):
                xg = x_ref[:, grp * gK:(grp + 1) * gK]                 # static lane slice
                o_ref[:, grp * gN:(grp + 1) * gN] = jnp.dot(           # direct lane-dense store
                    xg, w_ref[grp], preferred_element_type=jnp.float32
                ).astype(o_ref.dtype)
        else:
            # gN not a multiple of 128: keep a single wide unmasked store, but cast each
            # group's result early so live temporaries are output-dtype, not f32.
            outs = []
            for grp in range(ng):
                xg = x_ref[:, grp * gK:(grp + 1) * gK]
                outs.append(
                    jnp.dot(xg, w_ref[grp],
                            preferred_element_type=jnp.float32).astype(o_ref.dtype))
            o_ref[...] = outs[0] if ng == 1 else jnp.concatenate(outs, axis=-1)
    return kernel


def _group_tiled_kernel(x_ref, w_ref, o_ref):
    """Path B: one block-diagonal group per grid step (weights streamed, not all resident)."""
    o_ref[...] = jnp.dot(x_ref[...], w_ref[0],
                         preferred_element_type=jnp.float32).astype(o_ref.dtype)


# ----------------------------- tiling helpers ----------------------------------------------

def _pick_batch_tile(batch, per_row_bytes, resident_bytes, vmem_budget, sublane):
    """Pick a batch tile: fits VMEM, multiple of the sublane unit, prefers >=2 grid steps
    (pipelining + v7x dual TensorCore) and a tile that divides batch (no pad copy)."""
    avail = max(vmem_budget - resident_bytes, per_row_bytes * sublane)
    cap = max(sublane, min(2048, avail // per_row_bytes))
    cap = (cap // sublane) * sublane
    if batch >= 2 * sublane:                       # keep at least 2 grid steps when possible
        cap = min(cap, max(sublane, ((batch // 2) // sublane) * sublane))
    # largest sublane-multiple tile <= cap that divides batch exactly
    for cand in range(cap, sublane - 1, -sublane):
        if batch % cand == 0:
            return cand, 0
    if batch <= cap:
        return batch, 0                            # single full-extent block (always legal)
    # TODO(synk): masked tail store instead of the pad copy when no divisor tile exists.
    tb = cap
    return tb, (-batch) % tb


def _pack_block_diagonal(weights, g):
    """(num_blocks, K, N) -> (num_blocks//g, g*K, g*N) block-diagonal groups."""
    nb, K, N = weights.shape
    if g == 1:
        return weights
    ng = nb // g
    wg = weights.reshape(ng, g, K, N)
    eye = jnp.eye(g, dtype=weights.dtype)
    # [grp, a, k, b, n] = W[grp*g + a, k, n] * delta(a, b)
    packed = wg[:, :, :, None, :] * eye[None, :, None, :, None]
    return packed.reshape(ng, g * K, g * N)


# ----------------------------- public entry point ------------------------------------------

def group_linear(x, weights, *, batch_tile=None):
    """x: (batch, num_blocks, K); weights: (num_blocks, K, N) -> (batch, num_blocks, N)."""
    batch, num_blocks, K = x.shape
    nb_w, K_w, N = weights.shape
    assert nb_w == num_blocks and K_w == K

    dtype = x.dtype
    itemsize = jnp.dtype(dtype).itemsize
    sublane = _sublane_multiple(dtype)
    mxu = _mxu_dim()
    vmem_cap = _vmem_capacity_bytes()
    vmem_budget = int(vmem_cap * 0.70)            # generation-aware (~90 MiB v5e/v6e, ~45 MiB v7x)

    # ---- block-diagonal packing: g blocks per MXU pass (largest divisor of num_blocks) ----
    g_cap = max(1, mxu // max(K, N))
    g = 1
    for d in range(min(g_cap, num_blocks), 0, -1):
        if num_blocks % d == 0:
            g = d
            break
    ng = num_blocks // g
    gK, gN = g * K, g * N

    # Packed weights (metadata-only when g == 1). In a real model this would be precomputed.
    w_packed = _pack_block_diagonal(weights, g)
    packed_bytes = int(w_packed.size) * itemsize

    lane_in = num_blocks * K      # == ng * gK
    lane_out = num_blocks * N     # == ng * gN

    # Path A if the packed weights (budgeted at 2x for a possible second pipeline buffer)
    # fit comfortably in VMEM; otherwise stream one group per grid step (Path B), which
    # needs lane-dense per-group tiles when ng > 1.
    use_resident_weights = (2 * packed_bytes) <= int(0.6 * vmem_budget)
    if not use_resident_weights and ng > 1 and (gK % 128 != 0 or gN % 128 != 0):
        use_resident_weights = True  # TODO(synk): masked-lane group tiling for odd gK/gN.

    resident_bytes = 2 * packed_bytes if use_resident_weights else 2 * gK * gN * itemsize
    # double-buffered x/out rows + one f32 group result per row
    per_row = 2 * (lane_in + lane_out) * itemsize + gN * 4

    if batch_tile is not None:
        tb = batch_tile
        pad = (-batch) % tb
    else:
        tb, pad = _pick_batch_tile(batch, per_row, resident_bytes, vmem_budget, sublane)

    x2 = x.reshape(batch, lane_in)                # metadata-only reshape
    if pad:
        x2 = jnp.pad(x2, ((0, pad), (0, 0)))
    batch_p = batch + pad

    vmem_needed = tb * per_row + resident_bytes
    vmem_limit = int(min(vmem_cap, max(vmem_needed + (8 << 20), 32 << 20)))

    flops = 2 * batch * num_blocks * K * N
    bytes_accessed = (batch * num_blocks * K + int(w_packed.size)
                      + batch * num_blocks * N) * itemsize
    cost = pl.CostEstimate(flops=flops, transcendentals=0, bytes_accessed=bytes_accessed)

    if use_resident_weights:
        # -------- Path A: packed weights VMEM-resident (constant index map) --------
        grid = (batch_p // tb,)
        store_per_group = (ng == 1) or (gN % 128 == 0)
        out2 = pl.pallas_call(
            _make_resident_kernel(ng, gK, gN, store_per_group),
            out_shape=jax.ShapeDtypeStruct((batch_p, lane_out), dtype),
            grid_spec=pltpu.PrefetchScalarGridSpec(
                num_scalar_prefetch=0,
                grid=grid,
                in_specs=[
                    # x tile: lane dim is the full nb*K extent -> contiguous, lane-dense DMA.
                    pl.BlockSpec((tb, lane_in), lambda i: (i, 0)),
                    # packed weights: full array, constant index -> DMA'd once, VMEM-resident.
                    pl.BlockSpec((ng, gK, gN), lambda i: (0, 0, 0)),
                ],
                # output tile: full nb*N lane extent -> unmasked lane-dense stores.
                out_specs=pl.BlockSpec((tb, lane_out), lambda i: (i, 0)),
            ),
            compiler_params=pltpu.CompilerParams(
                dimension_semantics=("parallel",),
                vmem_limit_bytes=vmem_limit,
            ),
            cost_estimate=cost,
        )(x2, w_packed)
    else:
        # -------- Path B: weights tiled over a group grid axis (one group resident) --------
        grid = (batch_p // tb, ng)
        out2 = pl.pallas_call(
            _group_tiled_kernel,
            out_shape=jax.ShapeDtypeStruct((batch_p, lane_out), dtype),
            grid_spec=pltpu.PrefetchScalarGridSpec(
                num_scalar_prefetch=0,
                grid=grid,
                in_specs=[
                    pl.BlockSpec((tb, gK), lambda i, j: (i, j)),
                    pl.BlockSpec((1, gK, gN), lambda i, j: (j, 0, 0)),
                ],
                out_specs=pl.BlockSpec((tb, gN), lambda i, j: (i, j)),
            ),
            compiler_params=pltpu.CompilerParams(
                dimension_semantics=("parallel", "arbitrary"),
                vmem_limit_bytes=vmem_limit,
            ),
            cost_estimate=cost,
        )(x2, w_packed)

    if pad:
        out2 = out2[:batch]
    return out2.reshape(batch, num_blocks, N)     # metadata-only reshape back


if __name__ == "__main__":
    # Small shapes consistent with the module's forward; batch chosen so the grid has >= 2
    # steps (exercises software pipelining / dual-TC sharding) and the block-diag packing path.
    batch = 64
    num_blocks = 4
    input_size = 32
    output_size = 32

    key = jax.random.PRNGKey(0)
    kx, kw = jax.random.split(key)

    x = jax.random.normal(kx, (batch, num_blocks, input_size), dtype=jnp.float32)
    # nn.Parameter(0.01 * torch.randn(num_blocks, input_size, output_size))
    weights = 0.01 * jax.random.normal(
        kw, (num_blocks, input_size, output_size), dtype=jnp.float32
    )

    out = jax.block_until_ready(jax.jit(group_linear)(x, weights))

    # Reference: plain-JAX equivalent of the PyTorch forward (permute / bmm / permute).
    ref = jnp.einsum("bni,nio->bno", x, weights)
    assert out.shape == (batch, num_blocks, output_size)
    assert jnp.allclose(out, ref, atol=1e-5, rtol=1e-5)

    print("KERNEL_OK")
</pallas_src>

<mosaic_0001>
module attributes {stable_mosaic.version = 11 : i64} {
  func.func @kernel(%arg0: i32, %arg1: memref<32x128xf32, #tpu.memory_space<vmem>>, %arg2: memref<1x128x128xf32, #tpu.memory_space<vmem>>, %arg3: memref<32x128xf32, #tpu.memory_space<vmem>>) attributes {dimension_semantics = [#tpu.dimension_semantics<parallel>], iteration_bounds = array<i64: 2>, scalar_prefetch = 0 : i64, scratch_operands = 0 : i64, tpu.core_type = #tpu.core_type<tc>, window_params = [{transform_indices = @transform_0, window_bounds = array<i64: 32, 128>}, {pipeline_mode = #tpu.pipeline_mode<synchronous>, transform_indices = @transform_1, window_bounds = array<i64: 1, 128, 128>}, {transform_indices = @transform_2, window_bounds = array<i64: 32, 128>}]} {
    %c0 = arith.constant 0 : index
    %c0_0 = arith.constant 0 : index
    %0 = vector.load %arg1[%c0, %c0_0] : memref<32x128xf32, #tpu.memory_space<vmem>>, vector<32x128xf32>
    %c0_1 = arith.constant 0 : index
    %c0_2 = arith.constant 0 : index
    %c0_3 = arith.constant 0 : index
    %1 = vector.load %arg2[%c0_1, %c0_2, %c0_3] : memref<1x128x128xf32, #tpu.memory_space<vmem>>, vector<1x128x128xf32>
    %2 = vector.shape_cast %1 : vector<1x128x128xf32> to vector<128x128xf32>
    %cst = arith.constant dense<0.000000e+00> : vector<32x128xf32>
    %3 = tpu.matmul %0, %2, %cst {dimension_numbers = #tpu.dot_dimension_numbers<[1], [0], [0], [1], [0, 0, 1, 1], [], []>} : vector<32x128xf32>, vector<128x128xf32>, vector<32x128xf32> -> vector<32x128xf32>
    %c0_4 = arith.constant 0 : index
    %c0_5 = arith.constant 0 : index
    %4 = vector.load %arg3[%c0_4, %c0_5] : memref<32x128xf32, #tpu.memory_space<vmem>>, vector<32x128xf32>
    tpu.vector_store %arg3[%c0_4, %c0_5], %3 {strides = array<i32>} : memref<32x128xf32, #tpu.memory_space<vmem>>, vector<32x128xf32>,
    return
  }
  func.func @transform_0(%arg0: i32) -> (i32, i32) {
    %c0_i32 = arith.constant 0 : i32
    %c0_i32_0 = arith.constant 0 : i32
    return %arg0, %c0_i32 : i32, i32
  }
  func.func @transform_1(%arg0: i32) -> (i32, i32, i32) {
    %c0_i32 = arith.constant 0 : i32
    %c0_i32_0 = arith.constant 0 : i32
    %c0_i32_1 = arith.constant 0 : i32
    %c0_i32_2 = arith.constant 0 : i32
    return %c0_i32, %c0_i32_0, %c0_i32_1 : i32, i32, i32
  }
  func.func @transform_2(%arg0: i32) -> (i32, i32) {
    %c0_i32 = arith.constant 0 : i32
    %c0_i32_0 = arith.constant 0 : i32
    return %arg0, %c0_i32 : i32, i32
  }
}

</mosaic_0001>

<llo_original>
// kernel: group_linear.1
$region0: #{group_linear.1}
  #allocation0 [shape = 'u32[]', space=smem, size = 0x4, offset = 0x4, fixed_abs, tag = 'smem constant byte address 0x4 - core index']
  #allocation1 [shape = 'u32[72,128]{1,0:T(1,128)}', space=vmem, size = 0x9000, scoped, tag = 'internal scratch']
  %s0 = inlined_call_operand.vmem [shape: f32[64,128], index: 0, kind: input, shape index: {}]
  %s1 = inlined_call_operand.vmem [shape: f32[1,128,128], index: 1, kind: input, shape index: {}]
  %s2 = inlined_call_operand.vmem [shape: f32[64,128], index: 2, kind: output, shape index: {}]
  %s3 = sld [smem:[#allocation0]]
  $region41: #{group_linear.1} parent=0
    _
  %s5 = ssub.s32 1, %s3
  %s6 = scalar_select 0, %s5, %s3
  loop: start=0, step=1, limit=4
  $region2: #{group_linear.1} parent=0 // loop_pre_header
    _
  $region3: #{group_linear.1} parent=0 // loop_header
    %s8 = sphi 0, %s12
    %p9 = scmp.ge.s32.totalorder %s8, 4
    %s18 = sphi 0, %s20
    %s21 = sphi 0, %s18
    %s22 = sphi 0, %s21
    %s38 = sphi 0, %s22
    %s42 = sphi 0, %s42
    %s44 = sphi 0, %s42
    %s45 = sphi 0, %s44
    %s59 = sphi 0, %s45
    %s65 = sphi 0, %s67
    %s68 = sphi 0, %s65
    %s69 = sphi 0, %s68
    %s85 = sphi 0, %s69
  $region4: #{group_linear.1} parent=0 // loop_header_branch
    %11 = sbr.rel (%p9) target = $region8
  $region5: #{group_linear.1} parent=0 // loop_body
    %s13 = ssub.s32 %s8, 1
    %s14 = ssub.s32 %s8, 2
    %s15 = sadd.s32 %s8, 1
    %s16 = ssub.s32 %s8, %s15
    %p17 = scmp.eq.s32.totalorder %s16, 0
    %s19 = sadd.s32 %s18, 1
    %s20 = scalar_select %p17, %s18, %s19
    %p23 = pneg %p17
    %p24 = scmp.eq.s32.totalorder %s8, 1
    %p25 = por %p23, %p24
    %p26 = scmp.ne.s32.totalorder %s18, %s21
    %p27 = scmp.eq.s32.totalorder %s8, 0
    %p28 = por %p26, %p27
    %p29 = scmp.ne.s32.totalorder %s18, %s21
    %p30 = scmp.eq.s32.totalorder %s13, 1
    %p31 = por %p29, %p30
    %p32 = scmp.ne.s32.totalorder %s21, %s22
    %p33 = scmp.eq.s32.totalorder %s13, 0
    %p34 = por %p32, %p33
    %p35 = scmp.ne.s32.totalorder %s21, %s22
    %p36 = scmp.eq.s32.totalorder %s14, 1
    %p37 = por %p35, %p36
    %p39 = scmp.ne.s32.totalorder %s22, %s38
    %p40 = scmp.eq.s32.totalorder %s14, 0
    %p41 = por %p39, %p40
    %s43 = sadd.s32 %s42, 1
    %p46 = scmp.eq.s32.totalorder %s8, 1
    %p47 = scmp.ne.s32.totalorder %s42, %s44
    %p48 = scmp.eq.s32.totalorder %s8, 0
    %p49 = por %p47, %p48
    %p50 = scmp.ne.s32.totalorder %s42, %s44
    %p51 = scmp.eq.s32.totalorder %s13, 1
    %p52 = por %p50, %p51
    %p53 = scmp.ne.s32.totalorder %s44, %s45
    %p54 = scmp.eq.s32.totalorder %s13, 0
    %p55 = por %p53, %p54
    %p56 = scmp.ne.s32.totalorder %s44, %s45
    %p57 = scmp.eq.s32.totalorder %s14, 1
    %p58 = por %p56, %p57
    %p60 = scmp.ne.s32.totalorder %s45, %s59
    %p61 = scmp.eq.s32.totalorder %s14, 0
    %p62 = por %p60, %p61
    %s63 = ssub.s32 %s8, %s15
    %p64 = scmp.eq.s32.totalorder %s63, 0
    %s66 = sadd.s32 %s65, 1
    %s67 = scalar_select %p64, %s65, %s66
    %p70 = pneg %p64
    %p71 = scmp.eq.s32.totalorder %s8, 1
    %p72 = por %p70, %p71
    %p73 = scmp.ne.s32.totalorder %s65, %s68
    %p74 = scmp.eq.s32.totalorder %s8, 0
    %p75 = por %p73, %p74
    %p76 = scmp.ne.s32.totalorder %s65, %s68
    %p77 = scmp.eq.s32.totalorder %s13, 1
    %p78 = por %p76, %p77
    %p79 = scmp.ne.s32.totalorder %s68, %s69
    %p80 = scmp.eq.s32.totalorder %s13, 0
    %p81 = por %p79, %p80
    %p82 = scmp.ne.s32.totalorder %s68, %s69
    %p83 = scmp.eq.s32.totalorder %s14, 1
    %p84 = por %p82, %p83
    %p86 = scmp.ne.s32.totalorder %s69, %s85
    %p87 = scmp.eq.s32.totalorder %s14, 0
    %p88 = por %p86, %p87
    %p89 = scmp.le.s32.totalorder 1, %s8
    %p90 = scmp.lt.s32.totalorder %s8, 3
    %p91 = pnand %p89, %p90
    %p92 = pneg %p91
    // Predicated region
    $region9: #{group_linear.1} parent=5 // pred_check
      _
    $region10: #{group_linear.1} parent=5 // pred_check_branch
      %94 = sbr.rel (%p91) target = $region12
    $region11: #{group_linear.1} parent=5 // pred_region
      %s95 = ssub.s32 %s8, 1
      // Predicated region
      $region13: #{group_linear.1} parent=11 // pred_check
        %p96 = pneg %p55
      $region14: #{group_linear.1} parent=11 // pred_check_branch
        %98 = sbr.rel (%p96) target = $region16
      $region15: #{group_linear.1} parent=11 // pred_region
        _
      $region16: #{group_linear.1} parent=11 // pred_fallthru
        _
    $region12: #{group_linear.1} parent=5 // pred_fallthru
      _
    %p99 = scmp.lt.s32.totalorder %s8, 2
    // Predicated region
    $region17: #{group_linear.1} parent=5 // pred_check
      %p100 = pneg %p99
    $region18: #{group_linear.1} parent=5 // pred_check_branch
      %102 = sbr.rel (%p100) target = $region20
    $region19: #{group_linear.1} parent=5 // pred_region
      // Predicated region
      $region21: #{group_linear.1} parent=19 // pred_check
        %p103 = pneg %p28
      $region22: #{group_linear.1} parent=19 // pred_check_branch
        %105 = sbr.rel (%p103) target = $region24
      $region23: #{group_linear.1} parent=19 // pred_region
        %s106 = smul.u32 4, %s8
        %p107 = scmp.lt.s32.totalorder %s106, 7
        %s108 = scalar_select %p107, %s106, 7
        %s109 = smul.addr %s108, 8
        %s110 = scalar_lea.vmem %s0, %s109
        %s111 = smul.u32 4, %s8
      $region24: #{group_linear.1} parent=19 // pred_fallthru
        _
    $region20: #{group_linear.1} parent=5 // pred_fallthru
      _
    %p112 = scmp.le.s32.totalorder 1, %s8
    %p113 = scmp.lt.s32.totalorder %s8, 3
    %p114 = pnand %p112, %p113
    %p115 = pneg %p114
    // Predicated region
    $region25: #{group_linear.1} parent=5 // pred_check
      _
    $region26: #{group_linear.1} parent=5 // pred_check_branch
      %117 = sbr.rel (%p114) target = $region28
    $region27: #{group_linear.1} parent=5 // pred_region
      %s118 = ssub.s32 %s8, 1
      %s119 = smul.u32 4, %s13
      %p120 = scmp.lt.s32.totalorder %s119, 7
      %s121 = scalar_select %p120, %s119, 7
      %s122 = smul.addr %s121, 8
      %s123 = scalar_lea.vmem %s0, %s122
      %p124 = pneg %p34
      %p125 = pneg %p31
      %p126 = pneg %p55
      %p127 = pneg %p52
      %p128 = pneg %p81
      %p129 = pneg %p78
      %s130 = smul.u32 4, %s13
      %p131 = scmp.lt.s32.totalorder %s130, 7
      %s132 = scalar_select %p131, %s130, 7
      %s133 = smul.addr %s132, 8
      %s134 = scalar_lea.vmem %s2, %s133
      %s135 = smul.u32 4, %s13
      %p136 = scmp.lt.s32.totalorder %s135, 7
      %s137 = scalar_select %p136, %s135, 7
      %s138 = smul.addr %s137, 8
      %s139 = scalar_lea.vmem %s0, %s138
      %s140 = smul.u32 4, %s13
      %s141 = smul.u32 4, %s13
      %p142 = scmp.lt.s32.totalorder %s141, 7
      %s143 = scalar_select %p142, %s141, 7
      %s144 = smul.addr %s143, 8
      %s145 = scalar_lea.vmem %s2, %s144
      %s146 = smul.u32 4, %s13
      %v147 = vld [vmem:[%s139] sm:$0xff]
      %v148 = vld [vmem:[%s139 + $0x8] sm:$0xff]
      %v149 = vld [vmem:[%s139 + $0x10] sm:$0xff]
      %v150 = vld [vmem:[%s139 + $0x18] sm:$0xff]
      %v151 = vld [vmem:[%s1] sm:$0xff]
      %v152 = vld [vmem:[%s1 + $0x8] sm:$0xff]
      %v153 = vld [vmem:[%s1 + $0x10] sm:$0xff]
      %v154 = vld [vmem:[%s1 + $0x18] sm:$0xff]
      %v155 = vld [vmem:[%s1 + $0x20] sm:$0xff]
      %v156 = vld [vmem:[%s1 + $0x28] sm:$0xff]
      %v157 = vld [vmem:[%s1 + $0x30] sm:$0xff]
      %v158 = vld [vmem:[%s1 + $0x38] sm:$0xff]
      %v159 = vld [vmem:[%s1 + $0x40] sm:$0xff]
      %v160 = vld [vmem:[%s1 + $0x48] sm:$0xff]
      %v161 = vld [vmem:[%s1 + $0x50] sm:$0xff]
      %v162 = vld [vmem:[%s1 + $0x58] sm:$0xff]
      %v163 = vld [vmem:[%s1 + $0x60] sm:$0xff]
      %v164 = vld [vmem:[%s1 + $0x68] sm:$0xff]
      %v165 = vld [vmem:[%s1 + $0x70] sm:$0xff]
      %v166 = vld [vmem:[%s1 + $0x78] sm:$0xff]
      %167 = vmatpush.msra.mxu0 %v166
      %168 = vmatpush.msra.mxu0 %v165
      %169 = vmatpush.msra.mxu0 %v164
      %170 = vmatpush.msra.mxu0 %v163
      %171 = vmatpush.msra.mxu0 %v162
      %172 = vmatpush.msra.mxu0 %v161
      %173 = vmatpush.msra.mxu0 %v160
      %174 = vmatpush.msra.mxu0 %v159
      %175 = vmatpush.msra.mxu0 %v158
      %176 = vmatpush.msra.mxu0 %v157
      %177 = vmatpush.msra.mxu0 %v156
      %178 = vmatpush.msra.mxu0 %v155
      %179 = vmatpush.msra.mxu0 %v154
      %180 = vmatpush.msra.mxu0 %v153
      %181 = vmatpush.msra.mxu0 %v152
      %182 = vmatpush.msra.mxu0 %v151
      %183 = vmatmul.f32.gmra.mxu0 %v147
      %v184 = vpop.f32.mrf.mxu0
      %v185 = vadd.f32 0.0, %v184
      %186 = vmatmul.f32.gmra.mxu0 %v148
      %v187 = vpop.f32.mrf.mxu0
      %v188 = vadd.f32 0.0, %v187
      %189 = vmatmul.f32.gmra.mxu0 %v149
      %v190 = vpop.f32.mrf.mxu0
      %v191 = vadd.f32 0.0, %v190
      %192 = vmatmul.f32.gmra.mxu0 %v150
      %v193 = vpop.f32.mrf.mxu0
      %v194 = vadd.f32 0.0, %v193
      %195 = vdwg.mxu0
      %196 = vst [vmem:[%s145] sm:$0xff] %v185
      %197 = vst [vmem:[%s145 + $0x8] sm:$0xff] %v188
      %198 = vst [vmem:[%s145 + $0x10] sm:$0xff] %v191
      %199 = vst [vmem:[%s145 + $0x18] sm:$0xff] %v194
      %s200 = smul.u32 4, %s13
      %p201 = scmp.lt.s32.totalorder %s200, 7
      %s202 = scalar_select %p201, %s200, 7
      %s203 = smul.addr %s202, 8
      %s204 = scalar_lea.vmem %s2, %s203
      // Predicated region
      $region29: #{group_linear.1} parent=27 // pred_check
        %p205 = pneg %p78
      $region30: #{group_linear.1} parent=27 // pred_check_branch
        %207 = sbr.rel (%p205) target = $region32
      $region31: #{group_linear.1} parent=27 // pred_region
        %s208 = smul.u32 4, %s13
      $region32: #{group_linear.1} parent=27 // pred_fallthru
        _
    $region28: #{group_linear.1} parent=5 // pred_fallthru
      _
    %p209 = scmp.le.s32.totalorder 2, %s8
    // Predicated region
    $region33: #{group_linear.1} parent=5 // pred_check
      %p210 = pneg %p209
    $region34: #{group_linear.1} parent=5 // pred_check_branch
      %212 = sbr.rel (%p210) target = $region36
    $region35: #{group_linear.1} parent=5 // pred_region
      %s213 = ssub.s32 %s8, 2
      // Predicated region
      $region37: #{group_linear.1} parent=35 // pred_check
        %p214 = pneg %p84
      $region38: #{group_linear.1} parent=35 // pred_check_branch
        %216 = sbr.rel (%p214) target = $region40
      $region39: #{group_linear.1} parent=35 // pred_region
        %s217 = smul.u32 4, %s14
        %p218 = scmp.lt.s32.totalorder %s217, 7
        %s219 = scalar_select %p218, %s217, 7
        %s220 = smul.addr %s219, 8
        %s221 = scalar_lea.vmem %s2, %s220
      $region40: #{group_linear.1} parent=35 // pred_fallthru
        _
    $region36: #{group_linear.1} parent=5 // pred_fallthru
      _
  $region6: #{group_linear.1} parent=0 // loop_footer
    %s12 = sadd.s32 1, %s8
  $region7: #{group_linear.1} parent=0 // loop_footer_branch
    %7 = sbr.rel target = $region3
  $region8: #{group_linear.1} parent=0 // loop_exit
    _

</llo_original>
